<compile_context>
chip_gen: v5e
topology: v5e:2x2
jax: 0.10.0
libtpu: 0.0.40
codegen_flags: <defaults>
</compile_context>

<pallas_src>
import jax
import jax.numpy as jnp
from jax.experimental import pallas as pl
from jax.experimental.pallas import tpu as pltpu


# --------------------------------------------------------------------------
# Kernels
# --------------------------------------------------------------------------
def _xv_scale_kernel(x_ref, vt_ref, s_ref, t_ref, acc_ref):
    """t = (x @ Vt) * s   with the in_features reduction tiled on grid axis 2."""
    k = pl.program_id(2)

    @pl.when(k == 0)
    def _init():
        acc_ref[...] = jnp.zeros_like(acc_ref)

    acc_ref[...] += jnp.dot(
        x_ref[...], vt_ref[...], preferred_element_type=jnp.float32
    )

    @pl.when(k == pl.num_programs(2) - 1)
    def _finalize():
        # (TB, TR) * (1, TR) broadcast: scale by singular values in-kernel.
        t_ref[...] = (acc_ref[...] * s_ref[...]).astype(t_ref.dtype)


def _tu_kernel(t_ref, ut_ref, o_ref, acc_ref):
    """out = t @ Ut   with the rank reduction tiled on grid axis 2."""
    k = pl.program_id(2)

    @pl.when(k == 0)
    def _init():
        acc_ref[...] = jnp.zeros_like(acc_ref)

    acc_ref[...] += jnp.dot(
        t_ref[...], ut_ref[...], preferred_element_type=jnp.float32
    )

    @pl.when(k == pl.num_programs(2) - 1)
    def _finalize():
        o_ref[...] = acc_ref[...].astype(o_ref.dtype)


# --------------------------------------------------------------------------
# Wrapper
# --------------------------------------------------------------------------
def _round_up(x: int, m: int) -> int:
    return ((x + m - 1) // m) * m


def _clamp_tile(requested: int, dim: int, quantum: int) -> int:
    """Tile = multiple of `quantum`, <= requested, <= dim rounded up to quantum."""
    t = min(requested, _round_up(dim, quantum))
    t = max(quantum, (t // quantum) * quantum)
    return t


def _vmem_limit_bytes() -> int:
    # Generation-aware: ~75% of physical VMEM (leave headroom for Mosaic
    # internal scratch / semaphores). Falls back to a safe 48 MiB.
    try:
        cap = pltpu.get_tpu_info().vmem_capacity_bytes
        return int(cap * 3 // 4)
    except Exception:
        return 48 * 1024 * 1024


def svf_linear(x, U, s, V, *, use_bf16=False, tb=512, to=512, tk=512, tr=512):
    """Pallas implementation of SVFLinear.forward.

    x: (batch, in_features), U: (out_features, rank), s: (rank,),
    V: (rank, in_features)  ->  (batch, out_features)

    use_bf16: cast x/U/V to bfloat16 (f32 MXU accumulation kept). ~2x MXU
    throughput on v6e/v7x, ~3x on v5e; disabled by default for exact f32
    numerics.
    """
    batch, in_features = x.shape
    out_features, rank = U.shape
    assert V.shape == (rank, in_features)
    assert s.shape == (rank,)
    out_dtype = x.dtype

    compute_dtype = jnp.bfloat16 if use_bf16 else jnp.float32
    itemsize = jnp.dtype(compute_dtype).itemsize
    sub_q = 16 if use_bf16 else 8  # dtype-aware sublane quantum

    # ---- tile sizes (lane-dense multiples of 128; sublane-quantum batch) ----
    tb = _clamp_tile(tb, batch, sub_q)
    to = _clamp_tile(to, out_features, 128)
    tk = _clamp_tile(tk, in_features, 128)
    tr = _clamp_tile(tr, rank, 128)

    # ---- zero-pad to tile multiples (exact: zero rows/cols contribute 0) ----
    b_p = _round_up(batch, tb)
    o_p = _round_up(out_features, to)
    i_p = _round_up(in_features, tk)
    r_p = _round_up(rank, tr)

    xc = jnp.pad(x, ((0, b_p - batch), (0, i_p - in_features))).astype(compute_dtype)
    # Pre-transpose once in the wrapper: canonical, lane-dense MXU RHS feeds.
    vt = jnp.pad(V.T, ((0, i_p - in_features), (0, r_p - rank))).astype(compute_dtype)
    ut = jnp.pad(U.T, ((0, r_p - rank), (0, o_p - out_features))).astype(compute_dtype)
    s2d = jnp.pad(s.reshape(1, rank), ((0, 0), (0, r_p - rank))).astype(jnp.float32)

    vmem_limit = _vmem_limit_bytes()
    cparams = pltpu.CompilerParams(
        dimension_semantics=("parallel", "parallel", "arbitrary"),
        vmem_limit_bytes=vmem_limit,
    )

    # ---------------- phase 1: t = (x @ Vt) * s ----------------
    ce1 = pl.CostEstimate(
        flops=2 * b_p * i_p * r_p,
        transcendentals=0,
        bytes_accessed=(b_p * i_p + i_p * r_p + r_p + b_p * r_p) * itemsize,
    )
    t = pl.pallas_call(
        _xv_scale_kernel,
        out_shape=jax.ShapeDtypeStruct((b_p, r_p), compute_dtype),
        grid=(b_p // tb, r_p // tr, i_p // tk),
        in_specs=[
            pl.BlockSpec((tb, tk), lambda i, j, k: (i, k)),   # x tile
            pl.BlockSpec((tk, tr), lambda i, j, k: (k, j)),   # Vt tile
            pl.BlockSpec((1, tr), lambda i, j, k: (0, j)),    # s slice
        ],
        out_specs=pl.BlockSpec((tb, tr), lambda i, j, k: (i, j)),
        scratch_shapes=[pltpu.VMEM((tb, tr), jnp.float32)],
        compiler_params=cparams,
        cost_estimate=ce1,
    )(xc, vt, s2d)

    # ---------------- phase 2: out = t @ Ut ----------------
    ce2 = pl.CostEstimate(
        flops=2 * b_p * r_p * o_p,
        transcendentals=0,
        bytes_accessed=(b_p * r_p + r_p * o_p) * itemsize
        + b_p * o_p * jnp.dtype(out_dtype).itemsize,
    )
    out_p = pl.pallas_call(
        _tu_kernel,
        out_shape=jax.ShapeDtypeStruct((b_p, o_p), out_dtype),
        grid=(b_p // tb, o_p // to, r_p // tr),
        in_specs=[
            pl.BlockSpec((tb, tr), lambda i, j, k: (i, k)),   # t tile
            pl.BlockSpec((tr, to), lambda i, j, k: (k, j)),   # Ut tile
        ],
        out_specs=pl.BlockSpec((tb, to), lambda i, j, k: (i, j)),
        scratch_shapes=[pltpu.VMEM((tb, to), jnp.float32)],
        compiler_params=cparams,
        cost_estimate=ce2,
    )(t, ut)

    return out_p[:batch, :out_features]


# --------------------------------------------------------------------------
# Demo / correctness check
# --------------------------------------------------------------------------
if __name__ == "__main__":
    # Small shapes consistent with the module; tile overrides force multi-step
    # grids in i, j and k (exercises the accumulator init/finalize paths).
    batch, in_features, out_features, rank = 64, 256, 384, 8

    key = jax.random.PRNGKey(0)
    kx, ku, ks, kv = jax.random.split(key, 4)

    x = jax.random.normal(kx, (batch, in_features), dtype=jnp.float32)
    U = jax.random.normal(ku, (out_features, rank), dtype=jnp.float32)
    # Module init is s = ones(rank); use a non-trivial s to verify the scaling path.
    s = 1.0 + 0.1 * jax.random.normal(ks, (rank,), dtype=jnp.float32)
    V = jax.random.normal(kv, (rank, in_features), dtype=jnp.float32)

    # Pure-JAX reference matching the PyTorch math exactly.
    W = U @ jnp.diag(s) @ V
    ref = x @ W.T

    # f32 path: grids -> phase1 (2, 1, 2), phase2 (2, 3, 1).
    out_f32 = jax.block_until_ready(
        svf_linear(x, U, s, V, use_bf16=False, tb=32, to=128, tk=128, tr=128)
    )
    assert out_f32.shape == (batch, out_features)
    assert jnp.allclose(out_f32, ref, atol=1e-4, rtol=1e-4), "f32 mismatch vs reference"

    # bf16 path (f32 accumulation): same grids, looser tolerance.
    out_bf16 = jax.block_until_ready(
        svf_linear(x, U, s, V, use_bf16=True, tb=32, to=128, tk=128, tr=128)
    )
    assert out_bf16.shape == (batch, out_features)
    assert jnp.allclose(out_bf16, ref, atol=1.0, rtol=5e-2), "bf16 mismatch vs reference"

    print("KERNEL_OK")
</pallas_src>

<mosaic_0001>
module attributes {stable_mosaic.version = 11 : i64} {
  func.func @_xv_scale_kernel(%arg0: i32, %arg1: i32, %arg2: i32, %arg3: memref<32x128xf32, #tpu.memory_space<vmem>>, %arg4: memref<128x128xf32, #tpu.memory_space<vmem>>, %arg5: memref<1x128xf32, #tpu.memory_space<vmem>>, %arg6: memref<32x128xf32, #tpu.memory_space<vmem>>, %arg7: memref<32x128xf32, #tpu.memory_space<vmem>>) attributes {dimension_semantics = [#tpu.dimension_semantics<parallel>, #tpu.dimension_semantics<parallel>, #tpu.dimension_semantics<arbitrary>], iteration_bounds = array<i64: 2, 1, 2>, scalar_prefetch = 0 : i64, scratch_operands = 1 : i64, tpu.core_type = #tpu.core_type<tc>, window_params = [{transform_indices = @transform_0, window_bounds = array<i64: 32, 128>}, {transform_indices = @transform_1, window_bounds = array<i64: 128, 128>}, {transform_indices = @transform_2, window_bounds = array<i64: 1, 128>}, {transform_indices = @transform_3, window_bounds = array<i64: 32, 128>}]} {
    %c0_i32 = arith.constant 0 : i32
    %0 = arith.cmpi eq, %arg2, %c0_i32 : i32
    %1 = arith.extui %0 : i1 to i32
    %c0_i32_0 = arith.constant 0 : i32
    %2 = arith.cmpi ne, %1, %c0_i32_0 : i32
    scf.if %2 {
      %cst_9 = arith.constant 0.000000e+00 : f32
      %12 = vector.broadcast %cst_9 : f32 to vector<32x128xf32>
      %c0_10 = arith.constant 0 : index
      %c0_11 = arith.constant 0 : index
      %13 = vector.load %arg7[%c0_10, %c0_11] : memref<32x128xf32, #tpu.memory_space<vmem>>, vector<32x128xf32>
      tpu.vector_store %arg7[%c0_10, %c0_11], %12 {strides = array<i32>} : memref<32x128xf32, #tpu.memory_space<vmem>>, vector<32x128xf32>,
    } else {
    }
    %c0 = arith.constant 0 : index
    %c0_1 = arith.constant 0 : index
    %3 = vector.load %arg7[%c0, %c0_1] : memref<32x128xf32, #tpu.memory_space<vmem>>, vector<32x128xf32>
    %c0_2 = arith.constant 0 : index
    %c0_3 = arith.constant 0 : index
    %4 = vector.load %arg3[%c0_2, %c0_3] : memref<32x128xf32, #tpu.memory_space<vmem>>, vector<32x128xf32>
    %c0_4 = arith.constant 0 : index
    %c0_5 = arith.constant 0 : index
    %5 = vector.load %arg4[%c0_4, %c0_5] : memref<128x128xf32, #tpu.memory_space<vmem>>, vector<128x128xf32>
    %cst = arith.constant dense<0.000000e+00> : vector<32x128xf32>
    %6 = tpu.matmul %4, %5, %cst {dimension_numbers = #tpu.dot_dimension_numbers<[1], [0], [0], [1], [0, 0, 1, 1], [], []>} : vector<32x128xf32>, vector<128x128xf32>, vector<32x128xf32> -> vector<32x128xf32>
    %7 = arith.addf %3, %6 : vector<32x128xf32>
    %c0_6 = arith.constant 0 : index
    %c0_7 = arith.constant 0 : index
    %8 = vector.load %arg7[%c0_6, %c0_7] : memref<32x128xf32, #tpu.memory_space<vmem>>, vector<32x128xf32>
    tpu.vector_store %arg7[%c0_6, %c0_7], %7 {strides = array<i32>} : memref<32x128xf32, #tpu.memory_space<vmem>>, vector<32x128xf32>,
    %c1_i32 = arith.constant 1 : i32
    %9 = arith.cmpi eq, %arg2, %c1_i32 : i32
    %10 = arith.extui %9 : i1 to i32
    %c0_i32_8 = arith.constant 0 : i32
    %11 = arith.cmpi ne, %10, %c0_i32_8 : i32
    scf.if %11 {
      %c0_9 = arith.constant 0 : index
      %c0_10 = arith.constant 0 : index
      %12 = vector.load %arg7[%c0_9, %c0_10] : memref<32x128xf32, #tpu.memory_space<vmem>>, vector<32x128xf32>
      %c0_11 = arith.constant 0 : index
      %c0_12 = arith.constant 0 : index
      %13 = vector.load %arg5[%c0_11, %c0_12] : memref<1x128xf32, #tpu.memory_space<vmem>>, vector<1x128xf32>
      %14 = vector.broadcast %13 : vector<1x128xf32> to vector<32x128xf32>
      %15 = arith.mulf %12, %14 : vector<32x128xf32>
      %c0_13 = arith.constant 0 : index
      %c0_14 = arith.constant 0 : index
      %16 = vector.load %arg6[%c0_13, %c0_14] : memref<32x128xf32, #tpu.memory_space<vmem>>, vector<32x128xf32>
      tpu.vector_store %arg6[%c0_13, %c0_14], %15 {strides = array<i32>} : memref<32x128xf32, #tpu.memory_space<vmem>>, vector<32x128xf32>,
    } else {
    }
    return
  }
  func.func @transform_0(%arg0: i32, %arg1: i32, %arg2: i32) -> (i32, i32) {
    %c0_i32 = arith.constant 0 : i32
    return %arg0, %arg2 : i32, i32
  }
  func.func @transform_1(%arg0: i32, %arg1: i32, %arg2: i32) -> (i32, i32) {
    %c0_i32 = arith.constant 0 : i32
    return %arg2, %arg1 : i32, i32
  }
  func.func @transform_2(%arg0: i32, %arg1: i32, %arg2: i32) -> (i32, i32) {
    %c0_i32 = arith.constant 0 : i32
    %c0_i32_0 = arith.constant 0 : i32
    return %c0_i32, %arg1 : i32, i32
  }
  func.func @transform_3(%arg0: i32, %arg1: i32, %arg2: i32) -> (i32, i32) {
    %c0_i32 = arith.constant 0 : i32
    return %arg0, %arg1 : i32, i32
  }
}

</mosaic_0001>

<llo_original>
// kernel: tpu_custom_call.1
$region0: #{tpu_custom_call.1}
  #allocation0 [shape = 'u32[]', space=smem, size = 0x4, offset = 0x4, fixed_abs, tag = 'smem constant byte address 0x4 - core index']
  #allocation1 [shape = 'u32[72,128]{1,0:T(1,128)}', space=vmem, size = 0x9000, scoped, tag = 'internal scratch']
  #allocation2 [shape = 'f32[32,128]{1,0:T(8,128)}', space=vmem, size = 0x4000, scoped, tag = 'scratch operand']
  %s0 = inlined_call_operand.hbm [shape: f32[64,256], index: 0, kind: input, shape index: {}]
  %s1 = inlined_call_operand.hbm [shape: f32[256,128], index: 1, kind: input, shape index: {}]
  %s2 = inlined_call_operand.vmem [shape: f32[1,128], index: 2, kind: input, shape index: {}]
  %s3 = inlined_call_operand.hbm [shape: f32[64,128], index: 3, kind: output, shape index: {}]
  %s4 = sld [smem:[#allocation0]]
  $region61: #{tpu_custom_call.1} parent=0
    _
  %s6 = ssub.s32 1, %s4
  %s7 = scalar_select 0, %s6, %s4
  $region1: #{tpu_custom_call.1} parent=0
    #allocation3 [shape = 'u8[32768]{0}', space=vmem, size = 0x8000, scoped, tag = 'input window, operand 0']
    #allocation4 [shape = 's32[2]{0}', space=sflag, size = 0x8, scoped, tag = 'scoped memory for tpu_custom_call.1']
    #allocation5 [shape = 's32[2]{0}', space=sflag, size = 0x8, scoped, tag = 'scoped memory for tpu_custom_call.1']
    #allocation6 [shape = 'u8[131072]{0}', space=vmem, size = 0x20000, scoped, tag = 'input window, operand 1']
    #allocation7 [shape = 's32[2]{0}', space=sflag, size = 0x8, scoped, tag = 'scoped memory for tpu_custom_call.1']
    #allocation8 [shape = 'u8[32768]{0}', space=vmem, size = 0x8000, scoped, tag = 'output window, operand 0']
    %8 = vsyncpa [#allocation4], 0
    %s9 = scalar_lea.sflag [#allocation4], 1
    %10 = vsyncpa %s9, 0
    %11 = vsyncpa [#allocation7], 0
    %s12 = scalar_lea.sflag [#allocation7], 1
    %13 = vsyncpa %s12, 0
    %14 = vsyncpa [#allocation5], 0
    %s15 = scalar_lea.sflag [#allocation5], 1
    %16 = vsyncpa %s15, 0
    loop: start=0, step=1, limit=6
    $region2: #{tpu_custom_call.1} parent=1 // loop_pre_header
      _
    $region3: #{tpu_custom_call.1} parent=1 // loop_header
      %s18 = sphi 0, %s22
      %p19 = scmp.ge.s32.totalorder %s18, 6
      %s25 = sphi 0, %s44
      %s26 = sphi 0, %s40
      %s27 = sphi 0, %s36
      %s28 = sphi 0, %s25
      %s29 = sphi 0, %s26
      %s30 = sphi 0, %s27
      %s31 = sphi 0, %s28
      %s32 = sphi 0, %s29
      %s33 = sphi 0, %s30
      %s49 = sphi 0, %s51
      %s52 = sphi 0, %s49
      %s53 = sphi 0, %s52
      %s69 = sphi 0, %s53
      %s77 = sphi 0, %s79
      %s80 = sphi 0, %s77
      %s81 = sphi 0, %s80
      %s97 = sphi 0, %s81
      %s103 = sphi 0, %s105
      %s106 = sphi 0, %s103
      %s107 = sphi 0, %s106
      %s123 = sphi 0, %s107
      %s131 = sphi 0, %s133
      %s134 = sphi 0, %s131
      %s135 = sphi 0, %s134
      %s151 = sphi 0, %s135
    $region4: #{tpu_custom_call.1} parent=1 // loop_header_branch
      %21 = sbr.rel (%p19) target = $region8
    $region5: #{tpu_custom_call.1} parent=1 // loop_body
      %s23 = ssub.s32 %s18, 1
      %s24 = ssub.s32 %s18, 2
      %s34 = sadd.s32 1, %s27
      %p35 = scmp.ge.s32.totalorder %s34, 2
      %s36 = scalar_select %p35, 0, %s34
      %s37 = sadd.s32 1, %s26
      %s38 = scalar_select %p35, %s37, %s26
      %p39 = scmp.ge.s32.totalorder %s38, 1
      %s40 = scalar_select %p39, 0, %s38
      %s41 = sadd.s32 1, %s25
      %s42 = scalar_select %p39, %s41, %s25
      %p43 = scmp.ge.s32.totalorder %s42, 2
      %s44 = scalar_select %p43, 0, %s42
      %s45 = ssub.s32 %s25, %s44
      %s46 = ssub.s32 %s27, %s36
      %s47 = sor.u32 %s45, %s46
      %p48 = scmp.eq.s32.totalorder %s47, 0
      %s50 = sadd.s32 %s49, 1
      %s51 = scalar_select %p48, %s49, %s50
      %p54 = pneg %p48
      %p55 = scmp.eq.s32.totalorder %s18, 3
      %p56 = por %p54, %p55
      %p57 = scmp.ne.s32.totalorder %s49, %s52
      %p58 = scmp.eq.s32.totalorder %s18, 0
      %p59 = por %p57, %p58
      %p60 = scmp.ne.s32.totalorder %s49, %s52
      %p61 = scmp.eq.s32.totalorder %s23, 3
      %p62 = por %p60, %p61
      %p63 = scmp.ne.s32.totalorder %s52, %s53
      %p64 = scmp.eq.s32.totalorder %s23, 0
      %p65 = por %p63, %p64
      %p66 = scmp.ne.s32.totalorder %s52, %s53
      %p67 = scmp.eq.s32.totalorder %s24, 3
      %p68 = por %p66, %p67
      %p70 = scmp.ne.s32.totalorder %s53, %s69
      %p71 = scmp.eq.s32.totalorder %s24, 0
      %p72 = por %p70, %p71
      %s73 = ssub.s32 %s27, %s36
      %s74 = ssub.s32 %s26, %s40
      %s75 = sor.u32 %s73, %s74
      %p76 = scmp.eq.s32.totalorder %s75, 0
      %s78 = sadd.s32 %s77, 1
      %s79 = scalar_select %p76, %s77, %s78
      %p82 = pneg %p76
      %p83 = scmp.eq.s32.totalorder %s18, 3
      %p84 = por %p82, %p83
      %p85 = scmp.ne.s32.totalorder %s77, %s80
      %p86 = scmp.eq.s32.totalorder %s18, 0
      %p87 = por %p85, %p86
      %p88 = scmp.ne.s32.totalorder %s77, %s80
      %p89 = scmp.eq.s32.totalorder %s23, 3
      %p90 = por %p88, %p89
      %p91 = scmp.ne.s32.totalorder %s80, %s81
      %p92 = scmp.eq.s32.totalorder %s23, 0
      %p93 = por %p91, %p92
      %p94 = scmp.ne.s32.totalorder %s80, %s81
      %p95 = scmp.eq.s32.totalorder %s24, 3
      %p96 = por %p94, %p95
      %p98 = scmp.ne.s32.totalorder %s81, %s97
      %p99 = scmp.eq.s32.totalorder %s24, 0
      %p100 = por %p98, %p99
      %s101 = ssub.s32 %s26, %s40
      %p102 = scmp.eq.s32.totalorder %s101, 0
      %s104 = sadd.s32 %s103, 1
      %s105 = scalar_select %p102, %s103, %s104
      %p108 = pneg %p102
      %p109 = scmp.eq.s32.totalorder %s18, 3
      %p110 = por %p108, %p109
      %p111 = scmp.ne.s32.totalorder %s103, %s106
      %p112 = scmp.eq.s32.totalorder %s18, 0
      %p113 = por %p111, %p112
      %p114 = scmp.ne.s32.totalorder %s103, %s106
      %p115 = scmp.eq.s32.totalorder %s23, 3
      %p116 = por %p114, %p115
      %p117 = scmp.ne.s32.totalorder %s106, %s107
      %p118 = scmp.eq.s32.totalorder %s23, 0
      %p119 = por %p117, %p118
      %p120 = scmp.ne.s32.totalorder %s106, %s107
      %p121 = scmp.eq.s32.totalorder %s24, 3
      %p122 = por %p120, %p121
      %p124 = scmp.ne.s32.totalorder %s107, %s123
      %p125 = scmp.eq.s32.totalorder %s24, 0
      %p126 = por %p124, %p125
      %s127 = ssub.s32 %s25, %s44
      %s128 = ssub.s32 %s26, %s40
      %s129 = sor.u32 %s127, %s128
      %p130 = scmp.eq.s32.totalorder %s129, 0
      %s132 = sadd.s32 %s131, 1
      %s133 = scalar_select %p130, %s131, %s132
      %p136 = pneg %p130
      %p137 = scmp.eq.s32.totalorder %s18, 3
      %p138 = por %p136, %p137
      %p139 = scmp.ne.s32.totalorder %s131, %s134
      %p140 = scmp.eq.s32.totalorder %s18, 0
      %p141 = por %p139, %p140
      %p142 = scmp.ne.s32.totalorder %s131, %s134
      %p143 = scmp.eq.s32.totalorder %s23, 3
      %p144 = por %p142, %p143
      %p145 = scmp.ne.s32.totalorder %s134, %s135
      %p146 = scmp.eq.s32.totalorder %s23, 0
      %p147 = por %p145, %p146
      %p148 = scmp.ne.s32.totalorder %s134, %s135
      %p149 = scmp.eq.s32.totalorder %s24, 3
      %p150 = por %p148, %p149
      %p152 = scmp.ne.s32.totalorder %s135, %s151
      %p153 = scmp.eq.s32.totalorder %s24, 0
      %p154 = por %p152, %p153
      %p155 = scmp.le.s32.totalorder 1, %s18
      %p156 = scmp.lt.s32.totalorder %s18, 5
      %p157 = pnand %p155, %p156
      %p158 = pneg %p157
      // Predicated region
      $region9: #{tpu_custom_call.1} parent=5 // pred_check
        _
      $region10: #{tpu_custom_call.1} parent=5 // pred_check_branch
        %160 = sbr.rel (%p157) target = $region12
      $region11: #{tpu_custom_call.1} parent=5 // pred_region
        %s161 = ssub.s32 %s18, 1
        // Predicated region
        $region13: #{tpu_custom_call.1} parent=11 // pred_check
          %p162 = pneg %p119
        $region14: #{tpu_custom_call.1} parent=11 // pred_check_branch
          %164 = sbr.rel (%p162) target = $region16
        $region15: #{tpu_custom_call.1} parent=11 // pred_region
          %p165 = scmp.lt.s32.totalorder %s29, 0
          %s166 = scalar_select %p165, %s29, 0
          %s167 = scalar_lea.vmem %s2, %s166
        $region16: #{tpu_custom_call.1} parent=11 // pred_fallthru
          _
      $region12: #{tpu_custom_call.1} parent=5 // pred_fallthru
        _
      %p168 = scmp.lt.s32.totalorder %s18, 4
      // Predicated region
      $region17: #{tpu_custom_call.1} parent=5 // pred_check
        %p169 = pneg %p168
      $region18: #{tpu_custom_call.1} parent=5 // pred_check_branch
        %171 = sbr.rel (%p169) target = $region20
      $region19: #{tpu_custom_call.1} parent=5 // pred_region
        // Predicated region
        $region21: #{tpu_custom_call.1} parent=19 // pred_check
          %p172 = pneg %p59
        $region22: #{tpu_custom_call.1} parent=19 // pred_check_branch
          %174 = sbr.rel (%p172) target = $region24
        $region23: #{tpu_custom_call.1} parent=19 // pred_region
          %s175 = sand.u32 %s49, 1
          %s176 = scalar_lea.sflag [#allocation4], %s175
          %s177 = sand.u32 %s49, 1
          %s178 = smul.addr %s177, 32
          %s179 = scalar_lea.vmem [#allocation3], %s178
          %s180 = smul.u32 4, %s25
          %182 = vsyncadd %s176, 0
          %s183 = smul.addr %s180, 2
          %s184 = sadd.s32 %s27, %s183
          %s185 = smul.addr %s184, 8
          %s186 = scalar_lea.hbm %s0, %s185
          %s187 = sshll.u32 %s186, 4
          %s188 = int_to_ptr.hbm [resolvable:$true] %s187
          %s189 = sshll.u32 %s179, 4
          %s190 = int_to_ptr.vmem [resolvable:$true] %s189
          %195 = dma.hbm_to_vmem [thread:$0]  %s188, 512, %s190, %s176, 256, 128, 8
        $region24: #{tpu_custom_call.1} parent=19 // pred_fallthru
          _
        // Predicated region
        $region25: #{tpu_custom_call.1} parent=19 // pred_check
          %p196 = pneg %p87
        $region26: #{tpu_custom_call.1} parent=19 // pred_check_branch
          %198 = sbr.rel (%p196) target = $region28
        $region27: #{tpu_custom_call.1} parent=19 // pred_region
          %s199 = sand.u32 %s77, 1
          %s200 = scalar_lea.sflag [#allocation7], %s199
          %s201 = sand.u32 %s77, 1
          %s202 = smul.addr %s201, 128
          %s203 = scalar_lea.vmem [#allocation6], %s202
          %s204 = smul.u32 16, %s27
          %206 = vsyncadd %s200, 0
          %s207 = sadd.s32 %s26, %s204
          %s208 = smul.addr %s207, 8
          %s209 = scalar_lea.hbm %s1, %s208
          %s210 = sshll.u32 %s209, 4
          %s211 = int_to_ptr.hbm [resolvable:$true] %s210
          %s212 = sshll.u32 %s203, 4
          %s213 = int_to_ptr.vmem [resolvable:$true] %s212
          %218 = dma.hbm_to_vmem [thread:$0]  %s211, 2048, %s213, %s200, 128, 128, 8
        $region28: #{tpu_custom_call.1} parent=19 // pred_fallthru
          _
      $region20: #{tpu_custom_call.1} parent=5 // pred_fallthru
        _
      %p219 = scmp.le.s32.totalorder 1, %s18
      %p220 = scmp.lt.s32.totalorder %s18, 5
      %p221 = pnand %p219, %p220
      %p222 = pneg %p221
      // Predicated region
      $region29: #{tpu_custom_call.1} parent=5 // pred_check
        _
      $region30: #{tpu_custom_call.1} parent=5 // pred_check_branch
        %224 = sbr.rel (%p221) target = $region32
      $region31: #{tpu_custom_call.1} parent=5 // pred_region
        %s225 = ssub.s32 %s18, 1
        %s226 = sand.u32 %s52, 1
        %s227 = scalar_lea.sflag [#allocation4], %s226
        %s228 = sand.u32 %s52, 1
        %s229 = smul.addr %s228, 32
        %s230 = scalar_lea.vmem [#allocation3], %s229
        // Predicated region
        $region33: #{tpu_custom_call.1} parent=31 // pred_check
          %p231 = pneg %p65
        $region34: #{tpu_custom_call.1} parent=31 // pred_check_branch
          %233 = sbr.rel (%p231) target = $region36
        $region35: #{tpu_custom_call.1} parent=31 // pred_region
          %235 = dma.done %s227, 512
        $region36: #{tpu_custom_call.1} parent=31 // pred_fallthru
          _
        %s236 = sand.u32 %s80, 1
        %s237 = scalar_lea.sflag [#allocation7], %s236
        %s238 = sand.u32 %s80, 1
        %s239 = smul.addr %s238, 128
        %s240 = scalar_lea.vmem [#allocation6], %s239
        // Predicated region
        $region37: #{tpu_custom_call.1} parent=31 // pred_check
          %p241 = pneg %p93
        $region38: #{tpu_custom_call.1} parent=31 // pred_check_branch
          %243 = sbr.rel (%p241) target = $region40
        $region39: #{tpu_custom_call.1} parent=31 // pred_region
          %245 = dma.done %s237, 2048
        $region40: #{tpu_custom_call.1} parent=31 // pred_fallthru
          _
        %s246 = sand.u32 %s52, 1
        %s247 = scalar_lea.sflag [#allocation4], %s246
        %s248 = sand.u32 %s52, 1
        %s249 = smul.addr %s248, 32
        %s250 = scalar_lea.vmem [#allocation3], %s249
        %p251 = pneg %p65
        %p252 = pneg %p62
        %s253 = sand.u32 %s80, 1
        %s254 = scalar_lea.sflag [#allocation7], %s253
        %s255 = sand.u32 %s80, 1
        %s256 = smul.addr %s255, 128
        %s257 = scalar_lea.vmem [#allocation6], %s256
        %p258 = pneg %p93
        %p259 = pneg %p90
        %p260 = scmp.lt.s32.totalorder %s29, 0
        %s261 = scalar_select %p260, %s29, 0
        %s262 = scalar_lea.vmem %s2, %s261
        %p263 = pneg %p119
        %p264 = pneg %p116
        %p265 = pneg %p147
        %p266 = pneg %p144
        %s267 = sand.u32 %s134, 1
        %s268 = scalar_lea.sflag [#allocation5], %s267
        %s269 = sand.u32 %s134, 1
        %s270 = smul.addr %s269, 32
        %s271 = scalar_lea.vmem [#allocation8], %s270
        %s272 = smul.u32 4, %s28
        %s273 = smul.u32 16, %s30
        %p274 = scmp.lt.s32.totalorder %s29, 0
        %s275 = scalar_select %p274, %s29, 0
        %s276 = scalar_lea.vmem %s2, %s275
        %s277 = smul.u32 4, %s28
        %p278 = scmp.eq.s32.totalorder %s30, 0
        // Predicated region
        $region41: #{tpu_custom_call.1} parent=31 // pred_check
          %p279 = pneg %p278
        $region42: #{tpu_custom_call.1} parent=31 // pred_check_branch
          %281 = sbr.rel (%p279) target = $region44
        $region43: #{tpu_custom_call.1} parent=31 // pred_region
          %282 = vst [vmem:[#allocation2] sm:$0xff] 0.0
          %283 = vst [vmem:[#allocation2 + $0x8] sm:$0xff] 0.0
          %284 = vst [vmem:[#allocation2 + $0x10] sm:$0xff] 0.0
          %285 = vst [vmem:[#allocation2 + $0x18] sm:$0xff] 0.0
        $region44: #{tpu_custom_call.1} parent=31 // pred_fallthru
          _
        %v286 = vld [vmem:[#allocation2] sm:$0xff]
        %v287 = vld [vmem:[#allocation2 + $0x8] sm:$0xff]
        %v288 = vld [vmem:[#allocation2 + $0x10] sm:$0xff]
        %v289 = vld [vmem:[#allocation2 + $0x18] sm:$0xff]
        %v290 = vld [vmem:[%s230] sm:$0xff]
        %v291 = vld [vmem:[%s230 + $0x8] sm:$0xff]
        %v292 = vld [vmem:[%s230 + $0x10] sm:$0xff]
        %v293 = vld [vmem:[%s230 + $0x18] sm:$0xff]
        %v294 = vld [vmem:[%s240] sm:$0xff]
        %v295 = vld [vmem:[%s240 + $0x8] sm:$0xff]
        %v296 = vld [vmem:[%s240 + $0x10] sm:$0xff]
        %v297 = vld [vmem:[%s240 + $0x18] sm:$0xff]
        %v298 = vld [vmem:[%s240 + $0x20] sm:$0xff]
        %v299 = vld [vmem:[%s240 + $0x28] sm:$0xff]
        %v300 = vld [vmem:[%s240 + $0x30] sm:$0xff]
        %v301 = vld [vmem:[%s240 + $0x38] sm:$0xff]
        %v302 = vld [vmem:[%s240 + $0x40] sm:$0xff]
        %v303 = vld [vmem:[%s240 + $0x48] sm:$0xff]
        %v304 = vld [vmem:[%s240 + $0x50] sm:$0xff]
        %v305 = vld [vmem:[%s240 + $0x58] sm:$0xff]
        %v306 = vld [vmem:[%s240 + $0x60] sm:$0xff]
        %v307 = vld [vmem:[%s240 + $0x68] sm:$0xff]
        %v308 = vld [vmem:[%s240 + $0x70] sm:$0xff]
        %v309 = vld [vmem:[%s240 + $0x78] sm:$0xff]
        %310 = vmatpush.msra.mxu0 %v309
        %311 = vmatpush.msra.mxu0 %v308
        %312 = vmatpush.msra.mxu0 %v307
        %313 = vmatpush.msra.mxu0 %v306
        %314 = vmatpush.msra.mxu0 %v305
        %315 = vmatpush.msra.mxu0 %v304
        %316 = vmatpush.msra.mxu0 %v303
        %317 = vmatpush.msra.mxu0 %v302
        %318 = vmatpush.msra.mxu0 %v301
        %319 = vmatpush.msra.mxu0 %v300
        %320 = vmatpush.msra.mxu0 %v299
        %321 = vmatpush.msra.mxu0 %v298
        %322 = vmatpush.msra.mxu0 %v297
        %323 = vmatpush.msra.mxu0 %v296
        %324 = vmatpush.msra.mxu0 %v295
        %325 = vmatpush.msra.mxu0 %v294
        %326 = vmatmul.f32.gmra.mxu0 %v290
        %v327 = vpop.f32.mrf.mxu0
        %v328 = vadd.f32 0.0, %v327
        %329 = vmatmul.f32.gmra.mxu0 %v291
        %v330 = vpop.f32.mrf.mxu0
        %v331 = vadd.f32 0.0, %v330
        %332 = vmatmul.f32.gmra.mxu0 %v292
        %v333 = vpop.f32.mrf.mxu0
        %v334 = vadd.f32 0.0, %v333
        %335 = vmatmul.f32.gmra.mxu0 %v293
        %v336 = vpop.f32.mrf.mxu0
        %v337 = vadd.f32 0.0, %v336
        %338 = vdwg.mxu0
        %v339 = vadd.f32 %v286, %v328
        %v340 = vadd.f32 %v287, %v331
        %v341 = vadd.f32 %v288, %v334
        %v342 = vadd.f32 %v289, %v337
        %343 = vst [vmem:[#allocation2] sm:$0xff] %v339
        %344 = vst [vmem:[#allocation2 + $0x8] sm:$0xff] %v340
        %345 = vst [vmem:[#allocation2 + $0x10] sm:$0xff] %v341
        %346 = vst [vmem:[#allocation2 + $0x18] sm:$0xff] %v342
        %p347 = scmp.eq.s32.totalorder %s30, 1
        // Predicated region
        $region45: #{tpu_custom_call.1} parent=31 // pred_check
          %p348 = pneg %p347
        $region46: #{tpu_custom_call.1} parent=31 // pred_check_branch
          %350 = sbr.rel (%p348) target = $region48
        $region47: #{tpu_custom_call.1} parent=31 // pred_region
          %v351 = vld [vmem:[#allocation2] sm:$0xff]
          %v352 = vld [vmem:[#allocation2 + $0x8] sm:$0xff]
          %v353 = vld [vmem:[#allocation2 + $0x10] sm:$0xff]
          %v354 = vld [vmem:[#allocation2 + $0x18] sm:$0xff]
          %v355 = vld [vmem:[%s276] sm:$0x1]
          %v357 = vperm.slane %v355, 0
          %v359 = vmul.f32 %v351, %v357
          %v360 = vmul.f32 %v352, %v357
          %v361 = vmul.f32 %v353, %v357
          %v362 = vmul.f32 %v354, %v357
          %363 = vst [vmem:[%s271] sm:$0xff] %v359
          %364 = vst [vmem:[%s271 + $0x8] sm:$0xff] %v360
          %365 = vst [vmem:[%s271 + $0x10] sm:$0xff] %v361
          %366 = vst [vmem:[%s271 + $0x18] sm:$0xff] %v362
        $region48: #{tpu_custom_call.1} parent=31 // pred_fallthru
          _
        %s367 = sand.u32 %s134, 1
        %s368 = scalar_lea.sflag [#allocation5], %s367
        %s369 = sand.u32 %s134, 1
        %s370 = smul.addr %s369, 32
        %s371 = scalar_lea.vmem [#allocation8], %s370
        // Predicated region
        $region49: #{tpu_custom_call.1} parent=31 // pred_check
          %p372 = pneg %p144
        $region50: #{tpu_custom_call.1} parent=31 // pred_check_branch
          %374 = sbr.rel (%p372) target = $region52
        $region51: #{tpu_custom_call.1} parent=31 // pred_region
          %s375 = smul.u32 4, %s28
          %377 = vsyncadd %s368, 0
          %s378 = sadd.s32 %s29, %s375
          %s379 = smul.addr %s378, 8
          %s380 = scalar_lea.hbm %s3, %s379
          %s381 = sshll.u32 %s371, 4
          %s382 = int_to_ptr.vmem [resolvable:$true] %s381
          %s383 = sshll.u32 %s380, 4
          %s384 = int_to_ptr.hbm [resolvable:$true] %s383
          %389 = dma.vmem_to_hbm [thread:$0]  %s382, 512, %s384, %s368, 128, 128, 8
        $region52: #{tpu_custom_call.1} parent=31 // pred_fallthru
          _
      $region32: #{tpu_custom_call.1} parent=5 // pred_fallthru
        _
      %p390 = scmp.le.s32.totalorder 2, %s18
      // Predicated region
      $region53: #{tpu_custom_call.1} parent=5 // pred_check
        %p391 = pneg %p390
      $region54: #{tpu_custom_call.1} parent=5 // pred_check_branch
        %393 = sbr.rel (%p391) target = $region56
      $region55: #{tpu_custom_call.1} parent=5 // pred_region
        %s394 = ssub.s32 %s18, 2
        // Predicated region
        $region57: #{tpu_custom_call.1} parent=55 // pred_check
          %p395 = pneg %p150
        $region58: #{tpu_custom_call.1} parent=55 // pred_check_branch
          %397 = sbr.rel (%p395) target = $region60
        $region59: #{tpu_custom_call.1} parent=55 // pred_region
          %s398 = sand.u32 %s135, 1
          %s399 = scalar_lea.sflag [#allocation5], %s398
          %s400 = sand.u32 %s135, 1
          %s401 = smul.addr %s400, 32
          %s402 = scalar_lea.vmem [#allocation8], %s401
          %404 = dma.done %s399, 512
        $region60: #{tpu_custom_call.1} parent=55 // pred_fallthru
          _
      $region56: #{tpu_custom_call.1} parent=5 // pred_fallthru
        _
    $region6: #{tpu_custom_call.1} parent=1 // loop_footer
      %s22 = sadd.s32 1, %s18
    $region7: #{tpu_custom_call.1} parent=1 // loop_footer_branch
      %17 = sbr.rel target = $region3
    $region8: #{tpu_custom_call.1} parent=1 // loop_exit
      _
    %405 = vsyncpa [#allocation4], 1
    %s406 = scalar_lea.sflag [#allocation4], 1
    %407 = vsyncpa %s406, 1
    %408 = vsyncpa [#allocation7], 1
    %s409 = scalar_lea.sflag [#allocation7], 1
    %410 = vsyncpa %s409, 1
    %411 = vsyncpa [#allocation5], 1
    %s412 = scalar_lea.sflag [#allocation5], 1
    %413 = vsyncpa %s412, 1

</llo_original>
